<compile_context>
chip_gen: v7x
topology: tpu7x:2x2x1
jax: 0.10.0
libtpu: 0.0.40
codegen_flags: <defaults>
</compile_context>

<pallas_src>
import functools

import jax
import jax.numpy as jnp
from jax.experimental import pallas as pl
from jax.experimental.pallas import tpu as pltpu


def _bert_embed_kernel(x_ref, ids_ref, pos_ref, table_ref, o_ref,
                       *, dropout_p, training, seed):
    x = x_ref[0]                       # (TS, E)
    ids = ids_ref[0]                   # (TS, 1) int32
    pos = pos_ref[...]
    if pos.ndim == 3:                  # true per-(batch, seq) pos_emb
        pos = pos[0]                   # (TS, E)

    # In-kernel embedding gather: one-hot (TS, V) @ table (V, E) on the MXU.
    tile_rows = ids.shape[0]
    var_len = table_ref.shape[0]
    col = jax.lax.broadcasted_iota(jnp.int32, (tile_rows, var_len), 1)
    onehot = (col == ids).astype(table_ref.dtype)            # (TS, V)
    var_emb = jnp.dot(onehot, table_ref[...],
                      preferred_element_type=jnp.float32)    # (TS, E) f32

    # Elementwise add in the input dtype (no forced f32 upcast for bf16 models).
    total = x + var_emb.astype(x.dtype) + pos

    if training and dropout_p > 0.0:
        # Inverted dropout via the TPU hardware PRNG; one seed per tile.
        # TODO(synk): the RNG stream cannot match torch's bit-for-bit
        # (statistics are equivalent).
        tile_id = pl.program_id(0) * pl.num_programs(1) + pl.program_id(1)
        pltpu.prng_seed(seed + tile_id)
        bits = pltpu.bitcast(pltpu.prng_random_bits(total.shape), jnp.uint32)
        thresh = jnp.uint32(min(int(dropout_p * (2 ** 32)), 2 ** 32 - 1))
        keep = bits >= thresh                                 # P(keep) = 1 - p
        scale = 1.0 / (1.0 - dropout_p)
        total = jnp.where(keep, total * scale, jnp.zeros_like(total))

    o_ref[0] = total.astype(o_ref.dtype)


def bert_embedding(x, variable_seq, pos_emb, table,
                   *, dropout_p=0.1, training=False, seed=0, seq_tile=512):
    """Pallas implementation of BERTEmbedding.forward.

    x:            [B, S, E]
    variable_seq: [B, S] int ids into `table`
    pos_emb:      [S, E], [1, S, E], or [B, S, E]
    table:        [var_len, E]  (VariableEmbedding weight)
    """
    B, S, E = x.shape
    V = table.shape[0]

    # Tile over the sequence axis. Either the full axis (small S) or a
    # multiple-of-8 tile; tails are handled by cdiv + Pallas boundary masking.
    TS = S if S <= seq_tile else seq_tile
    if S > seq_tile:
        assert seq_tile % 8 == 0, "seq_tile must be a multiple of 8"
    grid = (B, pl.cdiv(S, TS))

    ids3 = variable_seq.reshape(B, S, 1).astype(jnp.int32)

    # Keep per-position pos_emb at [S, E] (no broadcast materialization).
    if pos_emb.ndim == 3 and pos_emb.shape[0] == 1:
        pos_arg = pos_emb[0]
    else:
        pos_arg = pos_emb
    if pos_arg.ndim == 2:
        pos_spec = pl.BlockSpec((TS, E), lambda b, s: (s, 0))
    else:  # full [B, S, E]
        pos_spec = pl.BlockSpec((1, TS, E), lambda b, s: (b, s, 0))

    kernel = functools.partial(_bert_embed_kernel,
                               dropout_p=float(dropout_p),
                               training=bool(training),
                               seed=int(seed))

    out = pl.pallas_call(
        kernel,
        out_shape=jax.ShapeDtypeStruct((B, S, E), x.dtype),
        grid_spec=pltpu.PrefetchScalarGridSpec(
            num_scalar_prefetch=0,
            grid=grid,
            in_specs=[
                pl.BlockSpec((1, TS, E), lambda b, s: (b, s, 0)),   # x rows
                pl.BlockSpec((1, TS, 1), lambda b, s: (b, s, 0)),   # token ids
                pos_spec,                                           # pos_emb
                pl.BlockSpec((V, E), lambda b, s: (0, 0)),          # table (resident)
            ],
            out_specs=pl.BlockSpec((1, TS, E), lambda b, s: (b, s, 0)),
        ),
        compiler_params=pltpu.CompilerParams(
            dimension_semantics=("parallel", "parallel")),
    )(x, ids3, pos_arg, table)

    return out


if __name__ == "__main__":
    # Small, deterministic example shapes.
    B, S, E = 2, 256, 128     # batch, seq, embed_size
    VAR_LEN = 16              # vocab size of VariableEmbedding

    key = jax.random.PRNGKey(0)
    k_x, k_pos, k_tab, k_ids = jax.random.split(key, 4)

    x = jax.random.normal(k_x, (B, S, E), dtype=jnp.float32)
    # Per-position positional embedding (broadcast over batch by the module).
    pos_emb = jax.random.normal(k_pos, (1, S, E), dtype=jnp.float32)
    # nn.Embedding default init: N(0, 1)
    table = jax.random.normal(k_tab, (VAR_LEN, E), dtype=jnp.float32)
    variable_seq = jax.random.randint(k_ids, (B, S), 0, VAR_LEN, dtype=jnp.int32)

    # Eval mode (dropout = identity) so the result is deterministic and can be
    # checked exactly against the reference.  seq_tile=128 -> grid (2, 2).
    out = bert_embedding(x, variable_seq, pos_emb, table,
                         dropout_p=0.1, training=False, seq_tile=128)
    out = jax.block_until_ready(out)

    ref = x + table[variable_seq] + pos_emb
    assert out.shape == (B, S, E)
    assert jnp.allclose(out, ref, atol=1e-5, rtol=1e-5), \
        float(jnp.max(jnp.abs(out - ref)))

    print("KERNEL_OK")
</pallas_src>

<mosaic_0001>
module attributes {stable_mosaic.version = 11 : i64} {
  func.func @_bert_embed_kernel(%arg0: i32, %arg1: i32, %arg2: memref<1x128x128xf32, #tpu.memory_space<vmem>>, %arg3: memref<1x128x1xi32, #tpu.memory_space<vmem>>, %arg4: memref<128x128xf32, #tpu.memory_space<vmem>>, %arg5: memref<16x128xf32, #tpu.memory_space<vmem>>, %arg6: memref<1x128x128xf32, #tpu.memory_space<vmem>>) attributes {dimension_semantics = [#tpu.dimension_semantics<parallel>, #tpu.dimension_semantics<parallel>], iteration_bounds = array<i64: 2, 2>, scalar_prefetch = 0 : i64, scratch_operands = 0 : i64, tpu.core_type = #tpu.core_type<tc>, window_params = [{transform_indices = @transform_0, window_bounds = array<i64: 1, 128, 128>}, {transform_indices = @transform_1, window_bounds = array<i64: 1, 128, 1>}, {transform_indices = @transform_2, window_bounds = array<i64: 128, 128>}, {pipeline_mode = #tpu.pipeline_mode<synchronous>, transform_indices = @transform_3, window_bounds = array<i64: 16, 128>}, {transform_indices = @transform_4, window_bounds = array<i64: 1, 128, 128>}]} {
    %c0 = arith.constant 0 : index
    %c0_0 = arith.constant 0 : index
    %c0_1 = arith.constant 0 : index
    %0 = vector.load %arg2[%c0, %c0_0, %c0_1] : memref<1x128x128xf32, #tpu.memory_space<vmem>>, vector<1x128x128xf32>
    %1 = vector.shape_cast %0 : vector<1x128x128xf32> to vector<128x128xf32>
    %c0_2 = arith.constant 0 : index
    %c0_3 = arith.constant 0 : index
    %c0_4 = arith.constant 0 : index
    %2 = vector.load %arg3[%c0_2, %c0_3, %c0_4] : memref<1x128x1xi32, #tpu.memory_space<vmem>>, vector<1x128x1xi32>
    %3 = vector.shape_cast %2 : vector<1x128x1xi32> to vector<128x1xi32>
    %c0_5 = arith.constant 0 : index
    %c0_6 = arith.constant 0 : index
    %4 = vector.load %arg4[%c0_5, %c0_6] : memref<128x128xf32, #tpu.memory_space<vmem>>, vector<128x128xf32>
    %5 = tpu.iota {dimensions = array<i32: 1>} : vector<128x16xi32>
    %6 = vector.broadcast %3 : vector<128x1xi32> to vector<128x16xi32>
    %7 = arith.cmpi eq, %5, %6 : vector<128x16xi32>
    %8 = arith.extui %7 : vector<128x16xi1> to vector<128x16xi32>
    %9 = arith.sitofp %8 : vector<128x16xi32> to vector<128x16xf32>
    %c0_7 = arith.constant 0 : index
    %c0_8 = arith.constant 0 : index
    %10 = vector.load %arg5[%c0_7, %c0_8] : memref<16x128xf32, #tpu.memory_space<vmem>>, vector<16x128xf32>
    %cst = arith.constant dense<0.000000e+00> : vector<128x128xf32>
    %11 = tpu.matmul %9, %10, %cst {dimension_numbers = #tpu.dot_dimension_numbers<[1], [0], [0], [1], [0, 0, 1, 1], [], []>} : vector<128x16xf32>, vector<16x128xf32>, vector<128x128xf32> -> vector<128x128xf32>
    %12 = arith.addf %1, %11 : vector<128x128xf32>
    %13 = arith.addf %12, %4 : vector<128x128xf32>
    %c0_9 = arith.constant 0 : index
    %c0_10 = arith.constant 0 : index
    %c0_11 = arith.constant 0 : index
    %14 = vector.load %arg6[%c0_9, %c0_10, %c0_11] : memref<1x128x128xf32, #tpu.memory_space<vmem>>, vector<1x128x128xf32>
    %15 = vector.shape_cast %14 : vector<1x128x128xf32> to vector<128x128xf32>
    %16 = vector.shape_cast %13 : vector<128x128xf32> to vector<1x128x128xf32>
    tpu.vector_store %arg6[%c0_9, %c0_10, %c0_11], %16 {strides = array<i32>} : memref<1x128x128xf32, #tpu.memory_space<vmem>>, vector<1x128x128xf32>,
    return
  }
  func.func @transform_0(%arg0: i32, %arg1: i32) -> (i32, i32, i32) {
    %c0_i32 = arith.constant 0 : i32
    %c0_i32_0 = arith.constant 0 : i32
    return %arg0, %arg1, %c0_i32 : i32, i32, i32
  }
  func.func @transform_1(%arg0: i32, %arg1: i32) -> (i32, i32, i32) {
    %c0_i32 = arith.constant 0 : i32
    %c0_i32_0 = arith.constant 0 : i32
    return %arg0, %arg1, %c0_i32 : i32, i32, i32
  }
  func.func @transform_2(%arg0: i32, %arg1: i32) -> (i32, i32) {
    %c0_i32 = arith.constant 0 : i32
    %c0_i32_0 = arith.constant 0 : i32
    return %arg1, %c0_i32 : i32, i32
  }
  func.func @transform_3(%arg0: i32, %arg1: i32) -> (i32, i32) {
    %c0_i32 = arith.constant 0 : i32
    %c0_i32_0 = arith.constant 0 : i32
    %c0_i32_1 = arith.constant 0 : i32
    return %c0_i32, %c0_i32_0 : i32, i32
  }
  func.func @transform_4(%arg0: i32, %arg1: i32) -> (i32, i32, i32) {
    %c0_i32 = arith.constant 0 : i32
    %c0_i32_0 = arith.constant 0 : i32
    return %arg0, %arg1, %c0_i32 : i32, i32, i32
  }
}

</mosaic_0001>

<llo_original>
// kernel: tpu_custom_call.1
$region0: #{tpu_custom_call.1}
  #allocation0 [shape = 'u32[]', space=smem, size = 0x4, offset = 0x4, fixed_abs, tag = 'smem constant byte address 0x4 - core index']
  #allocation1 [shape = 'u32[144,128]{1,0:T(1,128)}', space=vmem, size = 0x12000, scoped, tag = 'internal scratch']
  %s0 = inlined_call_operand.vmem [shape: f32[2,256,128], index: 0, kind: input, shape index: {}]
  %s1 = inlined_call_operand.vmem [shape: s32[2,256,1], index: 1, kind: input, shape index: {}]
  %s2 = inlined_call_operand.hbm [shape: f32[256,128], index: 2, kind: input, shape index: {}]
  %s3 = inlined_call_operand.hbm [shape: f32[16,128], index: 3, kind: input, shape index: {}]
  %s4 = inlined_call_operand.hbm [shape: f32[2,256,128], index: 4, kind: output, shape index: {}]
  %s5 = sld [smem:[#allocation0]]
  $region57: #{tpu_custom_call.1} parent=0
    _
  %s7 = ssub.s32 1, %s5
  %s8 = scalar_select 0, %s7, %s5
  $region1: #{tpu_custom_call.1} parent=0
    #allocation2 [shape = 'u8[131072]{0}', space=vmem, size = 0x20000, scoped, tag = 'input window, operand 2']
    #allocation3 [shape = 's32[2]{0}', space=sflag, size = 0x8, scoped, tag = 'scoped memory for tpu_custom_call.1']
    #allocation4 [shape = 's32[2]{0}', space=sflag, size = 0x8, scoped, tag = 'scoped memory for tpu_custom_call.1']
    #allocation5 [shape = 'u8[8192]{0}', space=vmem, size = 0x2000, scoped, tag = 'input window, operand 3, single buffered']
    #allocation6 [shape = 's32[1]{0}', space=sflag, size = 0x4, scoped, tag = 'scoped memory for tpu_custom_call.1']
    #allocation7 [shape = 'u8[131072]{0}', space=vmem, size = 0x20000, scoped, tag = 'output window, operand 0']
    %9 = vsyncpa [#allocation3], 0
    %s10 = scalar_lea.sflag [#allocation3], 1
    %11 = vsyncpa %s10, 0
    %12 = vsyncpa [#allocation6], 0
    %13 = vsyncpa [#allocation4], 0
    %s14 = scalar_lea.sflag [#allocation4], 1
    %15 = vsyncpa %s14, 0
    loop: start=0, step=1, limit=6
    $region2: #{tpu_custom_call.1} parent=1 // loop_pre_header
      _
    $region3: #{tpu_custom_call.1} parent=1 // loop_header
      %s17 = sphi 0, %s21
      %p18 = scmp.ge.s32.totalorder %s17, 6
      %s24 = sphi 0, %s36
      %s25 = sphi 0, %s32
      %s26 = sphi 0, %s24
      %s27 = sphi 0, %s25
      %s28 = sphi 0, %s26
      %s29 = sphi 0, %s27
      %s41 = sphi 0, %s43
      %s44 = sphi 0, %s41
      %s45 = sphi 0, %s44
      %s61 = sphi 0, %s45
      %s69 = sphi 0, %s71
      %s72 = sphi 0, %s69
      %s73 = sphi 0, %s72
      %s89 = sphi 0, %s73
      %s95 = sphi 0, %s97
      %s98 = sphi 0, %s95
      %s99 = sphi 0, %s98
      %s115 = sphi 0, %s99
      %s119 = sphi 0, %s119
      %s121 = sphi 0, %s119
      %s122 = sphi 0, %s121
      %s136 = sphi 0, %s122
      %s144 = sphi 0, %s146
      %s147 = sphi 0, %s144
      %s148 = sphi 0, %s147
      %s164 = sphi 0, %s148
    $region4: #{tpu_custom_call.1} parent=1 // loop_header_branch
      %20 = sbr.rel (%p18) target = $region8
    $region5: #{tpu_custom_call.1} parent=1 // loop_body
      %s22 = ssub.s32 %s17, 1
      %s23 = ssub.s32 %s17, 2
      %s30 = sadd.s32 1, %s25
      %p31 = scmp.ge.s32.totalorder %s30, 2
      %s32 = scalar_select %p31, 0, %s30
      %s33 = sadd.s32 1, %s24
      %s34 = scalar_select %p31, %s33, %s24
      %p35 = scmp.ge.s32.totalorder %s34, 2
      %s36 = scalar_select %p35, 0, %s34
      %s37 = ssub.s32 %s24, %s36
      %s38 = ssub.s32 %s25, %s32
      %s39 = sor.u32 %s37, %s38
      %p40 = scmp.eq.s32.totalorder %s39, 0
      %s42 = sadd.s32 %s41, 1
      %s43 = scalar_select %p40, %s41, %s42
      %p46 = pneg %p40
      %p47 = scmp.eq.s32.totalorder %s17, 3
      %p48 = por %p46, %p47
      %p49 = scmp.ne.s32.totalorder %s41, %s44
      %p50 = scmp.eq.s32.totalorder %s17, 0
      %p51 = por %p49, %p50
      %p52 = scmp.ne.s32.totalorder %s41, %s44
      %p53 = scmp.eq.s32.totalorder %s22, 3
      %p54 = por %p52, %p53
      %p55 = scmp.ne.s32.totalorder %s44, %s45
      %p56 = scmp.eq.s32.totalorder %s22, 0
      %p57 = por %p55, %p56
      %p58 = scmp.ne.s32.totalorder %s44, %s45
      %p59 = scmp.eq.s32.totalorder %s23, 3
      %p60 = por %p58, %p59
      %p62 = scmp.ne.s32.totalorder %s45, %s61
      %p63 = scmp.eq.s32.totalorder %s23, 0
      %p64 = por %p62, %p63
      %s65 = ssub.s32 %s24, %s36
      %s66 = ssub.s32 %s25, %s32
      %s67 = sor.u32 %s65, %s66
      %p68 = scmp.eq.s32.totalorder %s67, 0
      %s70 = sadd.s32 %s69, 1
      %s71 = scalar_select %p68, %s69, %s70
      %p74 = pneg %p68
      %p75 = scmp.eq.s32.totalorder %s17, 3
      %p76 = por %p74, %p75
      %p77 = scmp.ne.s32.totalorder %s69, %s72
      %p78 = scmp.eq.s32.totalorder %s17, 0
      %p79 = por %p77, %p78
      %p80 = scmp.ne.s32.totalorder %s69, %s72
      %p81 = scmp.eq.s32.totalorder %s22, 3
      %p82 = por %p80, %p81
      %p83 = scmp.ne.s32.totalorder %s72, %s73
      %p84 = scmp.eq.s32.totalorder %s22, 0
      %p85 = por %p83, %p84
      %p86 = scmp.ne.s32.totalorder %s72, %s73
      %p87 = scmp.eq.s32.totalorder %s23, 3
      %p88 = por %p86, %p87
      %p90 = scmp.ne.s32.totalorder %s73, %s89
      %p91 = scmp.eq.s32.totalorder %s23, 0
      %p92 = por %p90, %p91
      %s93 = ssub.s32 %s25, %s32
      %p94 = scmp.eq.s32.totalorder %s93, 0
      %s96 = sadd.s32 %s95, 1
      %s97 = scalar_select %p94, %s95, %s96
      %p100 = pneg %p94
      %p101 = scmp.eq.s32.totalorder %s17, 3
      %p102 = por %p100, %p101
      %p103 = scmp.ne.s32.totalorder %s95, %s98
      %p104 = scmp.eq.s32.totalorder %s17, 0
      %p105 = por %p103, %p104
      %p106 = scmp.ne.s32.totalorder %s95, %s98
      %p107 = scmp.eq.s32.totalorder %s22, 3
      %p108 = por %p106, %p107
      %p109 = scmp.ne.s32.totalorder %s98, %s99
      %p110 = scmp.eq.s32.totalorder %s22, 0
      %p111 = por %p109, %p110
      %p112 = scmp.ne.s32.totalorder %s98, %s99
      %p113 = scmp.eq.s32.totalorder %s23, 3
      %p114 = por %p112, %p113
      %p116 = scmp.ne.s32.totalorder %s99, %s115
      %p117 = scmp.eq.s32.totalorder %s23, 0
      %p118 = por %p116, %p117
      %s120 = sadd.s32 %s119, 1
      %p123 = scmp.eq.s32.totalorder %s17, 3
      %p124 = scmp.ne.s32.totalorder %s119, %s121
      %p125 = scmp.eq.s32.totalorder %s17, 0
      %p126 = por %p124, %p125
      %p127 = scmp.ne.s32.totalorder %s119, %s121
      %p128 = scmp.eq.s32.totalorder %s22, 3
      %p129 = por %p127, %p128
      %p130 = scmp.ne.s32.totalorder %s121, %s122
      %p131 = scmp.eq.s32.totalorder %s22, 0
      %p132 = por %p130, %p131
      %p133 = scmp.ne.s32.totalorder %s121, %s122
      %p134 = scmp.eq.s32.totalorder %s23, 3
      %p135 = por %p133, %p134
      %p137 = scmp.ne.s32.totalorder %s122, %s136
      %p138 = scmp.eq.s32.totalorder %s23, 0
      %p139 = por %p137, %p138
      %s140 = ssub.s32 %s24, %s36
      %s141 = ssub.s32 %s25, %s32
      %s142 = sor.u32 %s140, %s141
      %p143 = scmp.eq.s32.totalorder %s142, 0
      %s145 = sadd.s32 %s144, 1
      %s146 = scalar_select %p143, %s144, %s145
      %p149 = pneg %p143
      %p150 = scmp.eq.s32.totalorder %s17, 3
      %p151 = por %p149, %p150
      %p152 = scmp.ne.s32.totalorder %s144, %s147
      %p153 = scmp.eq.s32.totalorder %s17, 0
      %p154 = por %p152, %p153
      %p155 = scmp.ne.s32.totalorder %s144, %s147
      %p156 = scmp.eq.s32.totalorder %s22, 3
      %p157 = por %p155, %p156
      %p158 = scmp.ne.s32.totalorder %s147, %s148
      %p159 = scmp.eq.s32.totalorder %s22, 0
      %p160 = por %p158, %p159
      %p161 = scmp.ne.s32.totalorder %s147, %s148
      %p162 = scmp.eq.s32.totalorder %s23, 3
      %p163 = por %p161, %p162
      %p165 = scmp.ne.s32.totalorder %s148, %s164
      %p166 = scmp.eq.s32.totalorder %s23, 0
      %p167 = por %p165, %p166
      %p168 = scmp.le.s32.totalorder 1, %s17
      %p169 = scmp.lt.s32.totalorder %s17, 5
      %p170 = pnand %p168, %p169
      %p171 = pneg %p170
      // Predicated region
      $region9: #{tpu_custom_call.1} parent=5 // pred_check
        _
      $region10: #{tpu_custom_call.1} parent=5 // pred_check_branch
        %173 = sbr.rel (%p170) target = $region12
      $region11: #{tpu_custom_call.1} parent=5 // pred_region
        %s174 = ssub.s32 %s17, 1
        // Predicated region
        $region13: #{tpu_custom_call.1} parent=11 // pred_check
          %p175 = pneg %p132
        $region14: #{tpu_custom_call.1} parent=11 // pred_check_branch
          %177 = sbr.rel (%p175) target = $region16
        $region15: #{tpu_custom_call.1} parent=11 // pred_region
          %s179 = ssub.s32 256, 256
          %180 = vsyncadd [#allocation6], %s179
          %s181 = sshll.u32 [#allocation5], 4
          %s182 = int_to_ptr.vmem [resolvable:$true] %s181
          %187 = dma.hbm_to_vmem [thread:$0]  %s3, 256, %s182, [#allocation6], 128, 128, 8
        $region16: #{tpu_custom_call.1} parent=11 // pred_fallthru
          _
      $region12: #{tpu_custom_call.1} parent=5 // pred_fallthru
        _
      %p188 = scmp.lt.s32.totalorder %s17, 4
      // Predicated region
      $region17: #{tpu_custom_call.1} parent=5 // pred_check
        %p189 = pneg %p188
      $region18: #{tpu_custom_call.1} parent=5 // pred_check_branch
        %191 = sbr.rel (%p189) target = $region20
      $region19: #{tpu_custom_call.1} parent=5 // pred_region
        // Predicated region
        $region21: #{tpu_custom_call.1} parent=19 // pred_check
          %p192 = pneg %p51
        $region22: #{tpu_custom_call.1} parent=19 // pred_check_branch
          %194 = sbr.rel (%p192) target = $region24
        $region23: #{tpu_custom_call.1} parent=19 // pred_region
          %s195 = smul.u32 16, %s25
          %p196 = scmp.lt.s32.totalorder %s24, 1
          %s197 = scalar_select %p196, %s24, 1
          %p198 = scmp.lt.s32.totalorder %s195, 31
          %s199 = scalar_select %p198, %s195, 31
          %s200 = smul.addr %s197, 32
          %s201 = sadd.s32 %s199, %s200
          %s202 = smul.addr %s201, 8
          %s203 = scalar_lea.vmem %s0, %s202
          %s204 = smul.u32 16, %s25
        $region24: #{tpu_custom_call.1} parent=19 // pred_fallthru
          _
        // Predicated region
        $region25: #{tpu_custom_call.1} parent=19 // pred_check
          %p205 = pneg %p79
        $region26: #{tpu_custom_call.1} parent=19 // pred_check_branch
          %207 = sbr.rel (%p205) target = $region28
        $region27: #{tpu_custom_call.1} parent=19 // pred_region
          %s208 = smul.u32 16, %s25
          %p209 = scmp.lt.s32.totalorder %s24, 1
          %s210 = scalar_select %p209, %s24, 1
          %p211 = scmp.lt.s32.totalorder %s208, 31
          %s212 = scalar_select %p211, %s208, 31
          %s213 = smul.addr %s210, 32
          %s214 = sadd.s32 %s212, %s213
          %s215 = smul.addr %s214, 8
          %s216 = scalar_lea.vmem %s1, %s215
          %s217 = smul.u32 16, %s25
        $region28: #{tpu_custom_call.1} parent=19 // pred_fallthru
          _
        // Predicated region
        $region29: #{tpu_custom_call.1} parent=19 // pred_check
          %p218 = pneg %p105
        $region30: #{tpu_custom_call.1} parent=19 // pred_check_branch
          %220 = sbr.rel (%p218) target = $region32
        $region31: #{tpu_custom_call.1} parent=19 // pred_region
          %s221 = sand.u32 %s95, 1
          %s222 = scalar_lea.sflag [#allocation3], %s221
          %s223 = sand.u32 %s95, 1
          %s224 = smul.addr %s223, 128
          %s225 = scalar_lea.vmem [#allocation2], %s224
          %s226 = smul.u32 16, %s25
          %s228 = ssub.s32 2048, 2048
          %229 = vsyncadd %s222, %s228
          %s230 = smul.addr %s226, 128
          %s231 = scalar_lea.hbm %s2, %s230
          %s232 = sshll.u32 %s225, 4
          %s233 = int_to_ptr.vmem [resolvable:$true] %s232
          %238 = dma.hbm_to_vmem [thread:$0]  %s231, 2048, %s233, %s222, 128, 128, 8
        $region32: #{tpu_custom_call.1} parent=19 // pred_fallthru
          _
      $region20: #{tpu_custom_call.1} parent=5 // pred_fallthru
        _
      %p239 = scmp.le.s32.totalorder 1, %s17
      %p240 = scmp.lt.s32.totalorder %s17, 5
      %p241 = pnand %p239, %p240
      %p242 = pneg %p241
      // Predicated region
      $region33: #{tpu_custom_call.1} parent=5 // pred_check
        _
      $region34: #{tpu_custom_call.1} parent=5 // pred_check_branch
        %244 = sbr.rel (%p241) target = $region36
      $region35: #{tpu_custom_call.1} parent=5 // pred_region
        %s245 = ssub.s32 %s17, 1
        %s246 = sand.u32 %s98, 1
        %s247 = scalar_lea.sflag [#allocation3], %s246
        %s248 = sand.u32 %s98, 1
        %s249 = smul.addr %s248, 128
        %s250 = scalar_lea.vmem [#allocation2], %s249
        // Predicated region
        $region37: #{tpu_custom_call.1} parent=35 // pred_check
          %p251 = pneg %p111
        $region38: #{tpu_custom_call.1} parent=35 // pred_check_branch
          %253 = sbr.rel (%p251) target = $region40
        $region39: #{tpu_custom_call.1} parent=35 // pred_region
          %254 = dma.done %s247, 2048
        $region40: #{tpu_custom_call.1} parent=35 // pred_fallthru
          _
        // Predicated region
        $region41: #{tpu_custom_call.1} parent=35 // pred_check
          %p255 = pneg %p132
        $region42: #{tpu_custom_call.1} parent=35 // pred_check_branch
          %257 = sbr.rel (%p255) target = $region44
        $region43: #{tpu_custom_call.1} parent=35 // pred_region
          %258 = dma.done [#allocation6], 256
        $region44: #{tpu_custom_call.1} parent=35 // pred_fallthru
          _
        %s259 = smul.u32 16, %s27
        %p260 = scmp.lt.s32.totalorder %s26, 1
        %s261 = scalar_select %p260, %s26, 1
        %p262 = scmp.lt.s32.totalorder %s259, 31
        %s263 = scalar_select %p262, %s259, 31
        %s264 = smul.addr %s261, 32
        %s265 = sadd.s32 %s263, %s264
        %s266 = smul.addr %s265, 8
        %s267 = scalar_lea.vmem %s0, %s266
        %p268 = pneg %p57
        %p269 = pneg %p54
        %s270 = smul.u32 16, %s27
        %p271 = scmp.lt.s32.totalorder %s26, 1
        %s272 = scalar_select %p271, %s26, 1
        %p273 = scmp.lt.s32.totalorder %s270, 31
        %s274 = scalar_select %p273, %s270, 31
        %s275 = smul.addr %s272, 32
        %s276 = sadd.s32 %s274, %s275
        %s277 = smul.addr %s276, 8
        %s278 = scalar_lea.vmem %s1, %s277
        %p279 = pneg %p85
        %p280 = pneg %p82
        %s281 = sand.u32 %s98, 1
        %s282 = scalar_lea.sflag [#allocation3], %s281
        %s283 = sand.u32 %s98, 1
        %s284 = smul.addr %s283, 128
        %s285 = scalar_lea.vmem [#allocation2], %s284
        %p286 = pneg %p111
        %p287 = pneg %p108
        %p288 = pneg %p132
        %p289 = pneg %p129
        %p290 = pneg %p160
        %p291 = pneg %p157
        %s292 = sand.u32 %s147, 1
        %s293 = scalar_lea.sflag [#allocation4], %s292
        %s294 = sand.u32 %s147, 1
        %s295 = smul.addr %s294, 128
        %s296 = scalar_lea.vmem [#allocation7], %s295
        %s297 = smul.u32 16, %s27
        %p298 = scmp.lt.s32.totalorder %s26, 1
        %s299 = scalar_select %p298, %s26, 1
        %p300 = scmp.lt.s32.totalorder %s297, 31
        %s301 = scalar_select %p300, %s297, 31
        %s302 = smul.addr %s299, 32
        %s303 = sadd.s32 %s301, %s302
        %s304 = smul.addr %s303, 8
        %s305 = scalar_lea.vmem %s0, %s304
        %s306 = smul.u32 16, %s27
        %s307 = smul.u32 16, %s27
        %p308 = scmp.lt.s32.totalorder %s26, 1
        %s309 = scalar_select %p308, %s26, 1
        %p310 = scmp.lt.s32.totalorder %s307, 31
        %s311 = scalar_select %p310, %s307, 31
        %s312 = smul.addr %s309, 32
        %s313 = sadd.s32 %s311, %s312
        %s314 = smul.addr %s313, 8
        %s315 = scalar_lea.vmem %s1, %s314
        %s316 = smul.u32 16, %s27
        %s317 = smul.u32 16, %s27
        %s318 = smul.u32 16, %s27
        %v319 = vld [vmem:[%s305] sm:$0xff]
        %v320 = vld [vmem:[%s305 + $0x8] sm:$0xff]
        %v321 = vld [vmem:[%s305 + $0x10] sm:$0xff]
        %v322 = vld [vmem:[%s305 + $0x18] sm:$0xff]
        %v323 = vld [vmem:[%s305 + $0x20] sm:$0xff]
        %v324 = vld [vmem:[%s305 + $0x28] sm:$0xff]
        %v325 = vld [vmem:[%s305 + $0x30] sm:$0xff]
        %v326 = vld [vmem:[%s305 + $0x38] sm:$0xff]
        %v327 = vld [vmem:[%s305 + $0x40] sm:$0xff]
        %v328 = vld [vmem:[%s305 + $0x48] sm:$0xff]
        %v329 = vld [vmem:[%s305 + $0x50] sm:$0xff]
        %v330 = vld [vmem:[%s305 + $0x58] sm:$0xff]
        %v331 = vld [vmem:[%s305 + $0x60] sm:$0xff]
        %v332 = vld [vmem:[%s305 + $0x68] sm:$0xff]
        %v333 = vld [vmem:[%s305 + $0x70] sm:$0xff]
        %v334 = vld [vmem:[%s305 + $0x78] sm:$0xff]
        %v335 = vld [vmem:[%s315] sm:$0xff]
        %v336 = vld [vmem:[%s315 + $0x8] sm:$0xff]
        %v337 = vld [vmem:[%s315 + $0x10] sm:$0xff]
        %v338 = vld [vmem:[%s315 + $0x18] sm:$0xff]
        %v339 = vld [vmem:[%s315 + $0x20] sm:$0xff]
        %v340 = vld [vmem:[%s315 + $0x28] sm:$0xff]
        %v341 = vld [vmem:[%s315 + $0x30] sm:$0xff]
        %v342 = vld [vmem:[%s315 + $0x38] sm:$0xff]
        %v343 = vld [vmem:[%s315 + $0x40] sm:$0xff]
        %v344 = vld [vmem:[%s315 + $0x48] sm:$0xff]
        %v345 = vld [vmem:[%s315 + $0x50] sm:$0xff]
        %v346 = vld [vmem:[%s315 + $0x58] sm:$0xff]
        %v347 = vld [vmem:[%s315 + $0x60] sm:$0xff]
        %v348 = vld [vmem:[%s315 + $0x68] sm:$0xff]
        %v349 = vld [vmem:[%s315 + $0x70] sm:$0xff]
        %v350 = vld [vmem:[%s315 + $0x78] sm:$0xff]
        %v351 = vld [vmem:[%s250] sm:$0xff]
        %v352 = vld [vmem:[%s250 + $0x8] sm:$0xff]
        %v353 = vld [vmem:[%s250 + $0x10] sm:$0xff]
        %v354 = vld [vmem:[%s250 + $0x18] sm:$0xff]
        %v355 = vld [vmem:[%s250 + $0x20] sm:$0xff]
        %v356 = vld [vmem:[%s250 + $0x28] sm:$0xff]
        %v357 = vld [vmem:[%s250 + $0x30] sm:$0xff]
        %v358 = vld [vmem:[%s250 + $0x38] sm:$0xff]
        %v359 = vld [vmem:[%s250 + $0x40] sm:$0xff]
        %v360 = vld [vmem:[%s250 + $0x48] sm:$0xff]
        %v361 = vld [vmem:[%s250 + $0x50] sm:$0xff]
        %v362 = vld [vmem:[%s250 + $0x58] sm:$0xff]
        %v363 = vld [vmem:[%s250 + $0x60] sm:$0xff]
        %v364 = vld [vmem:[%s250 + $0x68] sm:$0xff]
        %v365 = vld [vmem:[%s250 + $0x70] sm:$0xff]
        %v366 = vld [vmem:[%s250 + $0x78] sm:$0xff]
        %v367 = vlaneseq
        %v368 = vand.u32 %v367, 127
        %369 = vset.pattern.permute.xlu0 0
        %370 = vperm.xlu0 %369, %v335
        %v371 = vpop.permute.xlu0 %370
        %372 = vset.pattern.permute.xlu0 0
        %373 = vperm.xlu0 %372, %v336
        %v374 = vpop.permute.xlu0 %373
        %375 = vset.pattern.permute.xlu0 0
        %376 = vperm.xlu0 %375, %v337
        %v377 = vpop.permute.xlu0 %376
        %378 = vset.pattern.permute.xlu0 0
        %379 = vperm.xlu0 %378, %v338
        %v380 = vpop.permute.xlu0 %379
        %381 = vset.pattern.permute.xlu0 0
        %382 = vperm.xlu0 %381, %v339
        %v383 = vpop.permute.xlu0 %382
        %384 = vset.pattern.permute.xlu0 0
        %385 = vperm.xlu0 %384, %v340
        %v386 = vpop.permute.xlu0 %385
        %387 = vset.pattern.permute.xlu0 0
        %388 = vperm.xlu0 %387, %v341
        %v389 = vpop.permute.xlu0 %388
        %390 = vset.pattern.permute.xlu0 0
        %391 = vperm.xlu0 %390, %v342
        %v392 = vpop.permute.xlu0 %391
        %393 = vset.pattern.permute.xlu0 0
        %394 = vperm.xlu0 %393, %v343
        %v395 = vpop.permute.xlu0 %394
        %396 = vset.pattern.permute.xlu0 0
        %397 = vperm.xlu0 %396, %v344
        %v398 = vpop.permute.xlu0 %397
        %399 = vset.pattern.permute.xlu0 0
        %400 = vperm.xlu0 %399, %v345
        %v401 = vpop.permute.xlu0 %400
        %402 = vset.pattern.permute.xlu0 0
        %403 = vperm.xlu0 %402, %v346
        %v404 = vpop.permute.xlu0 %403
        %405 = vset.pattern.permute.xlu0 0
        %406 = vperm.xlu0 %405, %v347
        %v407 = vpop.permute.xlu0 %406
        %408 = vset.pattern.permute.xlu0 0
        %409 = vperm.xlu0 %408, %v348
        %v410 = vpop.permute.xlu0 %409
        %411 = vset.pattern.permute.xlu0 0
        %412 = vperm.xlu0 %411, %v349
        %v413 = vpop.permute.xlu0 %412
        %414 = vset.pattern.permute.xlu0 0
        %415 = vperm.xlu0 %414, %v350
        %v416 = vpop.permute.xlu0 %415
        %vm417 = vcmp.eq.s32.totalorder %v368, %v371
        %vm418 = vcmp.eq.s32.totalorder %v368, %v374
        %vm419 = vcmp.eq.s32.totalorder %v368, %v377
        %vm420 = vcmp.eq.s32.totalorder %v368, %v380
        %vm421 = vcmp.eq.s32.totalorder %v368, %v383
        %vm422 = vcmp.eq.s32.totalorder %v368, %v386
        %vm423 = vcmp.eq.s32.totalorder %v368, %v389
        %vm424 = vcmp.eq.s32.totalorder %v368, %v392
        %vm425 = vcmp.eq.s32.totalorder %v368, %v395
        %vm426 = vcmp.eq.s32.totalorder %v368, %v398
        %vm427 = vcmp.eq.s32.totalorder %v368, %v401
        %vm428 = vcmp.eq.s32.totalorder %v368, %v404
        %vm429 = vcmp.eq.s32.totalorder %v368, %v407
        %vm430 = vcmp.eq.s32.totalorder %v368, %v410
        %vm431 = vcmp.eq.s32.totalorder %v368, %v413
        %vm432 = vcmp.eq.s32.totalorder %v368, %v416
        %v433 = vsel %vm417, 1, 0
        %v434 = vsel %vm418, 1, 0
        %v435 = vsel %vm419, 1, 0
        %v436 = vsel %vm420, 1, 0
        %v437 = vsel %vm421, 1, 0
        %v438 = vsel %vm422, 1, 0
        %v439 = vsel %vm423, 1, 0
        %v440 = vsel %vm424, 1, 0
        %v441 = vsel %vm425, 1, 0
        %v442 = vsel %vm426, 1, 0
        %v443 = vsel %vm427, 1, 0
        %v444 = vsel %vm428, 1, 0
        %v445 = vsel %vm429, 1, 0
        %v446 = vsel %vm430, 1, 0
        %v447 = vsel %vm431, 1, 0
        %v448 = vsel %vm432, 1, 0
        %v449 = vcvt.s32.f32 %v433
        %v450 = vcvt.s32.f32 %v434
        %v451 = vcvt.s32.f32 %v435
        %v452 = vcvt.s32.f32 %v436
        %v453 = vcvt.s32.f32 %v437
        %v454 = vcvt.s32.f32 %v438
        %v455 = vcvt.s32.f32 %v439
        %v456 = vcvt.s32.f32 %v440
        %v457 = vcvt.s32.f32 %v441
        %v458 = vcvt.s32.f32 %v442
        %v459 = vcvt.s32.f32 %v443
        %v460 = vcvt.s32.f32 %v444
        %v461 = vcvt.s32.f32 %v445
        %v462 = vcvt.s32.f32 %v446
        %v463 = vcvt.s32.f32 %v447
        %v464 = vcvt.s32.f32 %v448
        %v465 = vld [vmem:[#allocation5] sm:$0xff]
        %v466 = vld [vmem:[#allocation5 + $0x8] sm:$0xff]
        %vm467 = vcmask 130048
        %v469 = vsel %vm467, %v449, 0
        %v472 = vsel %vm467, %v450, 0
        %v475 = vsel %vm467, %v451, 0
        %v478 = vsel %vm467, %v452, 0
        %v481 = vsel %vm467, %v453, 0
        %v484 = vsel %vm467, %v454, 0
        %v487 = vsel %vm467, %v455, 0
        %v490 = vsel %vm467, %v456, 0
        %v493 = vsel %vm467, %v457, 0
        %v496 = vsel %vm467, %v458, 0
        %v499 = vsel %vm467, %v459, 0
        %v502 = vsel %vm467, %v460, 0
        %v505 = vsel %vm467, %v461, 0
        %v508 = vsel %vm467, %v462, 0
        %v511 = vsel %vm467, %v463, 0
        %v514 = vsel %vm467, %v464, 0
        %516 = vmatprep.subr.mxu0 0.0
        %517 = vmatpush1.msra.mxu0 %v465
        %518 = vmatprep.subr.mxu0 0.0
        %519 = vmatpush1.msra.mxu0 %v466
        %520 = vmatprep.subr.mxu0 0.0
        %521 = vmatpush1.msra.mxu0 0.0
        %522 = vmatprep.subr.mxu0 0.0
        %523 = vmatpush1.msra.mxu0 0.0
        %524 = vmatprep.subr.mxu0 0.0
        %525 = vmatpush1.msra.mxu0 0.0
        %526 = vmatprep.subr.mxu0 0.0
        %527 = vmatpush1.msra.mxu0 0.0
        %528 = vmatprep.subr.mxu0 0.0
        %529 = vmatpush1.msra.mxu0 0.0
        %530 = vmatprep.subr.mxu0 0.0
        %531 = vmatpush1.msra.mxu0 0.0
        %532 = vmatprep.subr.mxu0 0.0
        %533 = vmatpush1.msra.mxu0 0.0
        %534 = vmatprep.subr.mxu0 0.0
        %535 = vmatpush1.msra.mxu0 0.0
        %536 = vmatprep.subr.mxu0 0.0
        %537 = vmatpush1.msra.mxu0 0.0
        %538 = vmatprep.subr.mxu0 0.0
        %539 = vmatpush1.msra.mxu0 0.0
        %540 = vmatprep.subr.mxu0 0.0
        %541 = vmatpush1.msra.mxu0 0.0
        %542 = vmatprep.subr.mxu0 0.0
        %543 = vmatpush1.msra.mxu0 0.0
        %544 = vmatprep.subr.mxu0 0.0
        %545 = vmatpush1.msra.mxu0 0.0
        %546 = vmatprep.subr.mxu0 0.0
        %547 = vmatpush1.msra.mxu0 0.0
        %548 = vmatprep.subr.mxu0 0.0
        %549 = vmatpush1.msra.mxu0 0.0
        %550 = vmatprep.subr.mxu0 0.0
        %551 = vmatpush1.msra.mxu0 0.0
        %552 = vmatprep.subr.mxu0 0.0
        %553 = vmatpush1.msra.mxu0 0.0
        %554 = vmatprep.subr.mxu0 0.0
        %555 = vmatpush1.msra.mxu0 0.0
        %556 = vmatprep.subr.mxu0 0.0
        %557 = vmatpush1.msra.mxu0 0.0
        %558 = vmatprep.subr.mxu0 0.0
        %559 = vmatpush1.msra.mxu0 0.0
        %560 = vmatprep.subr.mxu0 0.0
        %561 = vmatpush1.msra.mxu0 0.0
        %562 = vmatprep.subr.mxu0 0.0
        %563 = vmatpush1.msra.mxu0 0.0
        %564 = vmatprep.subr.mxu0 0.0
        %565 = vmatpush1.msra.mxu0 0.0
        %566 = vmatprep.subr.mxu0 0.0
        %567 = vmatpush1.msra.mxu0 0.0
        %568 = vmatprep.subr.mxu0 0.0
        %569 = vmatpush1.msra.mxu0 0.0
        %570 = vmatprep.subr.mxu0 0.0
        %571 = vmatpush1.msra.mxu0 0.0
        %572 = vmatprep.subr.mxu0 0.0
        %573 = vmatpush1.msra.mxu0 0.0
        %574 = vmatprep.subr.mxu0 0.0
        %575 = vmatpush1.msra.mxu0 0.0
        %576 = vmatprep.subr.mxu0 0.0
        %577 = vmatpush1.msra.mxu0 0.0
        %578 = vmatprep.subr.mxu0 0.0
        %579 = vmatpush1.msra.mxu0 0.0
        %580 = vmatprep.mubr.f32.mxu0 0.0
        %581 = vmatmul.mubr.f32.gmra.mrb[0].mxu0 %v469
        %v582 = vpop.f32.mrb[0].mxu0
        %v583 = vadd.f32 0.0, %v582
        %v584 = vpop.f32.mrb[0].mxu0
        %585 = vmatprep.mubr.f32.mxu0 0.0
        %586 = vmatmul.mubr.f32.gmra.mrb[0].mxu0 %v472
        %v587 = vpop.f32.mrb[0].mxu0
        %v588 = vadd.f32 0.0, %v587
        %v589 = vpop.f32.mrb[0].mxu0
        %590 = vmatprep.mubr.f32.mxu0 0.0
        %591 = vmatmul.mubr.f32.gmra.mrb[0].mxu0 %v475
        %v592 = vpop.f32.mrb[0].mxu0
        %v593 = vadd.f32 0.0, %v592
        %v594 = vpop.f32.mrb[0].mxu0
        %595 = vmatprep.mubr.f32.mxu0 0.0
        %596 = vmatmul.mubr.f32.gmra.mrb[0].mxu0 %v478
        %v597 = vpop.f32.mrb[0].mxu0
        %v598 = vadd.f32 0.0, %v597
        %v599 = vpop.f32.mrb[0].mxu0
        %600 = vmatprep.mubr.f32.mxu0 0.0
        %601 = vmatmul.mubr.f32.gmra.mrb[0].mxu0 %v481
        %v602 = vpop.f32.mrb[0].mxu0
        %v603 = vadd.f32 0.0, %v602
        %v604 = vpop.f32.mrb[0].mxu0
        %605 = vmatprep.mubr.f32.mxu0 0.0
        %606 = vmatmul.mubr.f32.gmra.mrb[0].mxu0 %v484
        %v607 = vpop.f32.mrb[0].mxu0
        %v608 = vadd.f32 0.0, %v607
        %v609 = vpop.f32.mrb[0].mxu0
        %610 = vmatprep.mubr.f32.mxu0 0.0
        %611 = vmatmul.mubr.f32.gmra.mrb[0].mxu0 %v487
        %v612 = vpop.f32.mrb[0].mxu0
        %v613 = vadd.f32 0.0, %v612
        %v614 = vpop.f32.mrb[0].mxu0
        %615 = vmatprep.mubr.f32.mxu0 0.0
        %616 = vmatmul.mubr.f32.gmra.mrb[0].mxu0 %v490
        %v617 = vpop.f32.mrb[0].mxu0
        %v618 = vadd.f32 0.0, %v617
        %v619 = vpop.f32.mrb[0].mxu0
        %620 = vmatprep.mubr.f32.mxu0 0.0
        %621 = vmatmul.mubr.f32.gmra.mrb[0].mxu0 %v493
        %v622 = vpop.f32.mrb[0].mxu0
        %v623 = vadd.f32 0.0, %v622
        %v624 = vpop.f32.mrb[0].mxu0
        %625 = vmatprep.mubr.f32.mxu0 0.0
        %626 = vmatmul.mubr.f32.gmra.mrb[0].mxu0 %v496
        %v627 = vpop.f32.mrb[0].mxu0
        %v628 = vadd.f32 0.0, %v627
        %v629 = vpop.f32.mrb[0].mxu0
        %630 = vmatprep.mubr.f32.mxu0 0.0
        %631 = vmatmul.mubr.f32.gmra.mrb[0].mxu0 %v499
        %v632 = vpop.f32.mrb[0].mxu0
        %v633 = vadd.f32 0.0, %v632
        %v634 = vpop.f32.mrb[0].mxu0
        %635 = vmatprep.mubr.f32.mxu0 0.0
        %636 = vmatmul.mubr.f32.gmra.mrb[0].mxu0 %v502
        %v637 = vpop.f32.mrb[0].mxu0
        %v638 = vadd.f32 0.0, %v637
        %v639 = vpop.f32.mrb[0].mxu0
        %640 = vmatprep.mubr.f32.mxu0 0.0
        %641 = vmatmul.mubr.f32.gmra.mrb[0].mxu0 %v505
        %v642 = vpop.f32.mrb[0].mxu0
        %v643 = vadd.f32 0.0, %v642
        %v644 = vpop.f32.mrb[0].mxu0
        %645 = vmatprep.mubr.f32.mxu0 0.0
        %646 = vmatmul.mubr.f32.gmra.mrb[0].mxu0 %v508
        %v647 = vpop.f32.mrb[0].mxu0
        %v648 = vadd.f32 0.0, %v647
        %v649 = vpop.f32.mrb[0].mxu0
        %650 = vmatprep.mubr.f32.mxu0 0.0
        %651 = vmatmul.mubr.f32.gmra.mrb[0].mxu0 %v511
        %v652 = vpop.f32.mrb[0].mxu0
        %v653 = vadd.f32 0.0, %v652
        %v654 = vpop.f32.mrb[0].mxu0
        %655 = vmatprep.mubr.f32.mxu0 0.0
        %656 = vmatmul.mubr.f32.gmra.mrb[0].mxu0 %v514
        %v657 = vpop.f32.mrb[0].mxu0
        %v658 = vadd.f32 0.0, %v657
        %v659 = vpop.f32.mrb[0].mxu0
        %660 = vdwg.mxu0
        %v661 = vadd.f32 %v319, %v583
        %v662 = vadd.f32 %v320, %v588
        %v663 = vadd.f32 %v321, %v593
        %v664 = vadd.f32 %v322, %v598
        %v665 = vadd.f32 %v323, %v603
        %v666 = vadd.f32 %v324, %v608
        %v667 = vadd.f32 %v325, %v613
        %v668 = vadd.f32 %v326, %v618
        %v669 = vadd.f32 %v327, %v623
        %v670 = vadd.f32 %v328, %v628
        %v671 = vadd.f32 %v329, %v633
        %v672 = vadd.f32 %v330, %v638
        %v673 = vadd.f32 %v331, %v643
        %v674 = vadd.f32 %v332, %v648
        %v675 = vadd.f32 %v333, %v653
        %v676 = vadd.f32 %v334, %v658
        %v677 = vadd.f32 %v661, %v351
        %v678 = vadd.f32 %v662, %v352
        %v679 = vadd.f32 %v663, %v353
        %v680 = vadd.f32 %v664, %v354
        %v681 = vadd.f32 %v665, %v355
        %v682 = vadd.f32 %v666, %v356
        %v683 = vadd.f32 %v667, %v357
        %v684 = vadd.f32 %v668, %v358
        %v685 = vadd.f32 %v669, %v359
        %v686 = vadd.f32 %v670, %v360
        %v687 = vadd.f32 %v671, %v361
        %v688 = vadd.f32 %v672, %v362
        %v689 = vadd.f32 %v673, %v363
        %v690 = vadd.f32 %v674, %v364
        %v691 = vadd.f32 %v675, %v365
        %v692 = vadd.f32 %v676, %v366
        %693 = vst [vmem:[%s296] sm:$0xff] %v677
        %694 = vst [vmem:[%s296 + $0x8] sm:$0xff] %v678
        %695 = vst [vmem:[%s296 + $0x10] sm:$0xff] %v679
        %696 = vst [vmem:[%s296 + $0x18] sm:$0xff] %v680
        %697 = vst [vmem:[%s296 + $0x20] sm:$0xff] %v681
        %698 = vst [vmem:[%s296 + $0x28] sm:$0xff] %v682
        %699 = vst [vmem:[%s296 + $0x30] sm:$0xff] %v683
        %700 = vst [vmem:[%s296 + $0x38] sm:$0xff] %v684
        %701 = vst [vmem:[%s296 + $0x40] sm:$0xff] %v685
        %702 = vst [vmem:[%s296 + $0x48] sm:$0xff] %v686
        %703 = vst [vmem:[%s296 + $0x50] sm:$0xff] %v687
        %704 = vst [vmem:[%s296 + $0x58] sm:$0xff] %v688
        %705 = vst [vmem:[%s296 + $0x60] sm:$0xff] %v689
        %706 = vst [vmem:[%s296 + $0x68] sm:$0xff] %v690
        %707 = vst [vmem:[%s296 + $0x70] sm:$0xff] %v691
        %708 = vst [vmem:[%s296 + $0x78] sm:$0xff] %v692
        %s709 = sand.u32 %s147, 1
        %s710 = scalar_lea.sflag [#allocation4], %s709
        %s711 = sand.u32 %s147, 1
        %s712 = smul.addr %s711, 128
        %s713 = scalar_lea.vmem [#allocation7], %s712
        // Predicated region
        $region45: #{tpu_custom_call.1} parent=35 // pred_check
          %p714 = pneg %p157
        $region46: #{tpu_custom_call.1} parent=35 // pred_check_branch
          %716 = sbr.rel (%p714) target = $region48
        $region47: #{tpu_custom_call.1} parent=35 // pred_region
          %s717 = smul.u32 16, %s27
          %s719 = ssub.s32 2048, 2048
          %720 = vsyncadd %s710, %s719
          %s721 = smul.addr %s26, 32
          %s722 = sadd.s32 %s717, %s721
          %s723 = smul.addr %s722, 128
          %s724 = scalar_lea.hbm %s4, %s723
          %s725 = sshll.u32 %s713, 4
          %s726 = int_to_ptr.vmem [resolvable:$true] %s725
          %731 = dma.vmem_to_hbm [thread:$0]  %s726, 2048, %s724, %s710, 128, 128, 8
        $region48: #{tpu_custom_call.1} parent=35 // pred_fallthru
          _
      $region36: #{tpu_custom_call.1} parent=5 // pred_fallthru
        _
      %p732 = scmp.le.s32.totalorder 2, %s17
      // Predicated region
      $region49: #{tpu_custom_call.1} parent=5 // pred_check
        %p733 = pneg %p732
      $region50: #{tpu_custom_call.1} parent=5 // pred_check_branch
        %735 = sbr.rel (%p733) target = $region52
      $region51: #{tpu_custom_call.1} parent=5 // pred_region
        %s736 = ssub.s32 %s17, 2
        // Predicated region
        $region53: #{tpu_custom_call.1} parent=51 // pred_check
          %p737 = pneg %p163
        $region54: #{tpu_custom_call.1} parent=51 // pred_check_branch
          %739 = sbr.rel (%p737) target = $region56
        $region55: #{tpu_custom_call.1} parent=51 // pred_region
          %s740 = sand.u32 %s148, 1
          %s741 = scalar_lea.sflag [#allocation4], %s740
          %s742 = sand.u32 %s148, 1
          %s743 = smul.addr %s742, 128
          %s744 = scalar_lea.vmem [#allocation7], %s743
          %745 = dma.done %s741, 2048
        $region56: #{tpu_custom_call.1} parent=51 // pred_fallthru
          _
      $region52: #{tpu_custom_call.1} parent=5 // pred_fallthru
        _
    $region6: #{tpu_custom_call.1} parent=1 // loop_footer
      %s21 = sadd.s32 1, %s17
    $region7: #{tpu_custom_call.1} parent=1 // loop_footer_branch
      %16 = sbr.rel target = $region3
    $region8: #{tpu_custom_call.1} parent=1 // loop_exit
      _
    %746 = vsyncpa [#allocation3], 1
    %s747 = scalar_lea.sflag [#allocation3], 1
    %748 = vsyncpa %s747, 1
    %749 = vsyncpa [#allocation6], 1
    %750 = vsyncpa [#allocation4], 1
    %s751 = scalar_lea.sflag [#allocation4], 1
    %752 = vsyncpa %s751, 1

</llo_original>
